<compile_context>
chip_gen: v6e
topology: v6e:2x2x1
jax: 0.10.0
libtpu: 0.0.40
codegen_flags: <defaults>
</compile_context>

<pallas_src>
import functools

import numpy as np
import jax
import jax.numpy as jnp
from jax import lax
from jax.experimental import pallas as pl

LANES = 128  # lane-aligned padded box count (suppressor axis)


def _nms_kernel(boxes_c_ref, boxes_r_ref, keep_ref, *, n, rows, iou_threshold):
    # Suppressor coordinates, lane-major (lane r = sorted box r); loaded once.
    x1r = boxes_r_ref[0:1, :]
    y1r = boxes_r_ref[1:2, :]
    x2r = boxes_r_ref[2:3, :]
    y2r = boxes_r_ref[3:4, :]
    area_r = (x2r - x1r) * (y2r - y1r)                            # (1, LANES)

    lane_iota = lax.broadcasted_iota(jnp.int32, (8, LANES), 1)    # (8, 128)
    sub_iota = lax.broadcasted_iota(jnp.int32, (8, 1), 0)         # (8, 1)
    # diff[s, l] = l - s : one-hot placement helper (lane r0+s <- sublane s).
    diff = lane_iota - lax.broadcasted_iota(jnp.int32, (8, LANES), 0)

    keep = jnp.zeros((1, LANES), jnp.float32)   # lane-major keep mask, in vregs

    for b in range(rows // 8):                  # static; fully unrolled
        r0 = 8 * b
        # Candidate coords for this block, sublane-major (8,1).
        # boxes_c is laid out (4, rows, 1) so every load is a contiguous,
        # sublane-aligned slice with zero lane offset.
        x1c = boxes_c_ref[0, r0:r0 + 8, :]
        y1c = boxes_c_ref[1, r0:r0 + 8, :]
        x2c = boxes_c_ref[2, r0:r0 + 8, :]
        y2c = boxes_c_ref[3, r0:r0 + 8, :]

        # Division-free overlap slab for this block, entirely in registers:
        #   S[c, r] = 1.0  iff  IoU(box r0+c, box r) > thr.
        iw = jnp.maximum(jnp.minimum(x2c, x2r) - jnp.maximum(x1c, x1r), 0.0)
        ih = jnp.maximum(jnp.minimum(y2c, y2r) - jnp.maximum(y1c, y1r), 0.0)
        inter = iw * ih                                           # (8, LANES)
        area_c = (x2c - x1c) * (y2c - y1c)                        # (8, 1)
        union = area_c + area_r - inter
        S = jnp.where(inter > iou_threshold * union, 1.0, 0.0)    # (8, LANES)

        row_valid = (r0 + sub_iota) < n                           # (8, 1) bool

        if b == 0:
            kb = jnp.where(row_valid, 1.0, 0.0)                   # no earlier boxes
        else:
            # Suppressed by a *kept* box of an earlier block. keep==0 on every
            # lane >= r0, so the r<c triangular constraint is implicit.
            ext = jnp.max(S * keep, axis=-1, keepdims=True)       # (8, 1)
            kb = jnp.where(row_valid & (ext <= 0.0), 1.0, 0.0)

        # Columns of this block's 8x8 diagonal sub-tile, pulled from the
        # in-register S (one-hot select + lane reduce). They do not depend on
        # kb, so they sit off the serial greedy chain; no VMEM loads.
        n_in_blk = min(8, n - r0)
        cols = [
            jnp.max(jnp.where(lane_iota == (r0 + j), S, 0.0),
                    axis=-1, keepdims=True)                       # (8,1) = S[:, r0+j]
            for j in range(max(0, n_in_blk - 1))
        ]

        # Serial intra-block greedy resolution on tiny (8,1)/(1,1) values.
        for j in range(max(0, n_in_blk - 1)):
            kj = kb[j:j + 1, :]                                   # (1,1) sublane slice
            suppress = (cols[j] > 0.0) & (kj > 0.0) & (sub_iota > j)
            kb = jnp.where(suppress, 0.0, kb)

        # Merge the block's decisions into lanes r0..r0+7 of keep with one
        # one-hot placement (strictly within this block's lanes).
        placed = jnp.max(jnp.where(diff == r0, kb, 0.0), axis=0, keepdims=True)
        keep = jnp.maximum(keep, placed)

    keep_ref[...] = keep                                          # single VMEM write


@functools.partial(jax.jit, static_argnames=("iou_threshold",))
def nms_without_score_thresholding(xyxy, person_conf, *, iou_threshold=0.5):
    """Returns (sorted_boxes_and_scores (N,5), keep_mask (N,) bool).

    The kept rows of `sorted_boxes_and_scores`, in order, equal the PyTorch
    module's `boxes_and_scores[selected_indices]`.
    """
    xyxy = xyxy.astype(jnp.float32)
    person_conf = person_conf.astype(jnp.float32)
    boxes_and_scores = jnp.concatenate([xyxy, person_conf[:, None]], axis=1)  # (n, 5)
    n = boxes_and_scores.shape[0]
    assert 1 <= n <= LANES, "increase LANES for more boxes"

    # Descending score; jnp.argsort is stable -> reproduces torchvision's
    # first-come behavior for tied scores.
    order = jnp.argsort(-boxes_and_scores[:, 4])
    sorted_bs = boxes_and_scores[order]                           # (n, 5)
    boxes_t = sorted_bs[:, :4].T                                  # (4, n)

    rows = max(8, -(-n // 8) * 8)                                 # sublane-aligned rows
    boxes_c = jnp.zeros((4, rows, 1), jnp.float32).at[:, :n, 0].set(boxes_t)
    boxes_r = jnp.zeros((4, LANES), jnp.float32).at[:, :n].set(boxes_t)

    keep = pl.pallas_call(
        functools.partial(_nms_kernel, n=n, rows=rows,
                          iou_threshold=float(iou_threshold)),
        out_shape=jax.ShapeDtypeStruct((1, LANES), jnp.float32),
    )(boxes_c, boxes_r)

    keep_mask = keep[0, :n] > 0.5
    return sorted_bs, keep_mask


# ----------------------------- reference (host) -----------------------------
def _reference_nms_numpy(boxes, scores, thr):
    order = np.argsort(-scores, kind="stable")
    keep = []
    suppressed = np.zeros(len(scores), dtype=bool)
    for i in order:
        if suppressed[i]:
            continue
        keep.append(i)
        x1 = np.maximum(boxes[i, 0], boxes[:, 0])
        y1 = np.maximum(boxes[i, 1], boxes[:, 1])
        x2 = np.minimum(boxes[i, 2], boxes[:, 2])
        y2 = np.minimum(boxes[i, 3], boxes[:, 3])
        inter = np.maximum(x2 - x1, 0.0) * np.maximum(y2 - y1, 0.0)
        area_i = (boxes[i, 2] - boxes[i, 0]) * (boxes[i, 3] - boxes[i, 1])
        area = (boxes[:, 2] - boxes[:, 0]) * (boxes[:, 3] - boxes[:, 1])
        union = area_i + area - inter
        iou = np.where(union > 0.0, inter / union, 0.0)
        suppressed |= iou > thr
    return np.array(keep, dtype=np.int64)


if __name__ == "__main__":
    key = jax.random.PRNGKey(0)
    k_c, k_s, k_conf = jax.random.split(key, 3)

    N = 16  # number of candidate boxes
    centers = jax.random.uniform(k_c, (N, 2), minval=0.0, maxval=10.0)
    half_sizes = jax.random.uniform(k_s, (N, 2), minval=0.5, maxval=2.0)
    xyxy = jnp.concatenate([centers - half_sizes, centers + half_sizes], axis=1)  # (N, 4)
    person_conf = jax.random.uniform(k_conf, (N,), minval=0.0, maxval=1.0)        # (N,)

    sorted_bs, keep_mask = nms_without_score_thresholding(
        xyxy, person_conf, iou_threshold=0.5)
    jax.block_until_ready((sorted_bs, keep_mask))

    # TODO(synk): the module's final dynamic-size gather
    # (boxes_and_scores[selected_indices]) stays in host glue — Pallas/XLA
    # outputs must be static-shaped.
    sorted_np = np.asarray(sorted_bs)
    keep_np = np.asarray(keep_mask)
    result = sorted_np[keep_np]

    # Check against a NumPy reference of torchvision.ops.nms semantics.
    boxes_np = np.asarray(xyxy, dtype=np.float32)
    scores_np = np.asarray(person_conf, dtype=np.float32)
    ref_idx = _reference_nms_numpy(boxes_np, scores_np, 0.5)
    ref = np.concatenate([boxes_np, scores_np[:, None]], axis=1)[ref_idx]

    assert result.shape == ref.shape, (result.shape, ref.shape)
    np.testing.assert_allclose(result, ref, rtol=1e-5, atol=1e-5)
    print("KERNEL_OK")
</pallas_src>

<mosaic_0001>
module attributes {stable_mosaic.version = 11 : i64} {
  func.func @_nms_kernel(%arg0: memref<4x16x1xf32, #tpu.memory_space<vmem>>, %arg1: memref<4x128xf32, #tpu.memory_space<vmem>>, %arg2: memref<1x128xf32, #tpu.memory_space<vmem>>) attributes {dimension_semantics = [], scalar_prefetch = 0 : i64, scratch_operands = 0 : i64, tpu.core_type = #tpu.core_type<tc>} {
    %c0 = arith.constant 0 : index
    %c0_0 = arith.constant 0 : index
    %0 = vector.load %arg1[%c0, %c0_0] : memref<4x128xf32, #tpu.memory_space<vmem>>, vector<1x128xf32>
    %c1 = arith.constant 1 : index
    %c0_1 = arith.constant 0 : index
    %1 = vector.load %arg1[%c1, %c0_1] : memref<4x128xf32, #tpu.memory_space<vmem>>, vector<1x128xf32>
    %c2 = arith.constant 2 : index
    %c0_2 = arith.constant 0 : index
    %2 = vector.load %arg1[%c2, %c0_2] : memref<4x128xf32, #tpu.memory_space<vmem>>, vector<1x128xf32>
    %c3 = arith.constant 3 : index
    %c0_3 = arith.constant 0 : index
    %3 = vector.load %arg1[%c3, %c0_3] : memref<4x128xf32, #tpu.memory_space<vmem>>, vector<1x128xf32>
    %4 = arith.subf %2, %0 : vector<1x128xf32>
    %5 = arith.subf %3, %1 : vector<1x128xf32>
    %6 = arith.mulf %4, %5 : vector<1x128xf32>
    %7 = tpu.iota {dimensions = array<i32: 1>} : vector<8x128xi32>
    %8 = tpu.iota {dimensions = array<i32: 0>} : vector<8x1xi32>
    %9 = tpu.iota {dimensions = array<i32: 0>} : vector<8x128xi32>
    %10 = arith.subi %7, %9 : vector<8x128xi32>
    %cst = arith.constant 0.000000e+00 : f32
    %11 = vector.broadcast %cst : f32 to vector<1x128xf32>
    %c0_4 = arith.constant 0 : index
    %c0_5 = arith.constant 0 : index
    %c0_6 = arith.constant 0 : index
    %12 = vector.load %arg0[%c0_4, %c0_5, %c0_6] : memref<4x16x1xf32, #tpu.memory_space<vmem>>, vector<1x8x1xf32>
    %13 = vector.shape_cast %12 : vector<1x8x1xf32> to vector<8x1xf32>
    %c1_7 = arith.constant 1 : index
    %c0_8 = arith.constant 0 : index
    %c0_9 = arith.constant 0 : index
    %14 = vector.load %arg0[%c1_7, %c0_8, %c0_9] : memref<4x16x1xf32, #tpu.memory_space<vmem>>, vector<1x8x1xf32>
    %15 = vector.shape_cast %14 : vector<1x8x1xf32> to vector<8x1xf32>
    %c2_10 = arith.constant 2 : index
    %c0_11 = arith.constant 0 : index
    %c0_12 = arith.constant 0 : index
    %16 = vector.load %arg0[%c2_10, %c0_11, %c0_12] : memref<4x16x1xf32, #tpu.memory_space<vmem>>, vector<1x8x1xf32>
    %17 = vector.shape_cast %16 : vector<1x8x1xf32> to vector<8x1xf32>
    %c3_13 = arith.constant 3 : index
    %c0_14 = arith.constant 0 : index
    %c0_15 = arith.constant 0 : index
    %18 = vector.load %arg0[%c3_13, %c0_14, %c0_15] : memref<4x16x1xf32, #tpu.memory_space<vmem>>, vector<1x8x1xf32>
    %19 = vector.shape_cast %18 : vector<1x8x1xf32> to vector<8x1xf32>
    %20 = vector.broadcast %17 : vector<8x1xf32> to vector<8x128xf32>
    %21 = vector.broadcast %2 : vector<1x128xf32> to vector<8x128xf32>
    %22 = arith.minimumf %20, %21 : vector<8x128xf32>
    %23 = vector.broadcast %13 : vector<8x1xf32> to vector<8x128xf32>
    %24 = vector.broadcast %0 : vector<1x128xf32> to vector<8x128xf32>
    %25 = arith.maximumf %23, %24 : vector<8x128xf32>
    %26 = arith.subf %22, %25 : vector<8x128xf32>
    %cst_16 = arith.constant 0.000000e+00 : f32
    %27 = vector.broadcast %cst_16 : f32 to vector<8x128xf32>
    %28 = arith.maximumf %26, %27 : vector<8x128xf32>
    %29 = vector.broadcast %19 : vector<8x1xf32> to vector<8x128xf32>
    %30 = vector.broadcast %3 : vector<1x128xf32> to vector<8x128xf32>
    %31 = arith.minimumf %29, %30 : vector<8x128xf32>
    %32 = vector.broadcast %15 : vector<8x1xf32> to vector<8x128xf32>
    %33 = vector.broadcast %1 : vector<1x128xf32> to vector<8x128xf32>
    %34 = arith.maximumf %32, %33 : vector<8x128xf32>
    %35 = arith.subf %31, %34 : vector<8x128xf32>
    %cst_17 = arith.constant 0.000000e+00 : f32
    %36 = vector.broadcast %cst_17 : f32 to vector<8x128xf32>
    %37 = arith.maximumf %35, %36 : vector<8x128xf32>
    %38 = arith.mulf %28, %37 : vector<8x128xf32>
    %39 = arith.subf %17, %13 : vector<8x1xf32>
    %40 = arith.subf %19, %15 : vector<8x1xf32>
    %41 = arith.mulf %39, %40 : vector<8x1xf32>
    %42 = vector.broadcast %41 : vector<8x1xf32> to vector<8x128xf32>
    %43 = vector.broadcast %6 : vector<1x128xf32> to vector<8x128xf32>
    %44 = arith.addf %42, %43 : vector<8x128xf32>
    %45 = arith.subf %44, %38 : vector<8x128xf32>
    %cst_18 = arith.constant 5.000000e-01 : f32
    %46 = vector.broadcast %cst_18 : f32 to vector<8x128xf32>
    %47 = arith.mulf %46, %45 : vector<8x128xf32>
    %48 = arith.cmpf ogt, %38, %47 : vector<8x128xf32>
    %cst_19 = arith.constant 1.000000e+00 : f32
    %cst_20 = arith.constant 0.000000e+00 : f32
    %49 = vector.broadcast %cst_19 : f32 to vector<8x128xf32>
    %50 = vector.broadcast %cst_20 : f32 to vector<8x128xf32>
    %51 = arith.select %48, %49, %50 : vector<8x128xi1>, vector<8x128xf32>
    %c0_i32 = arith.constant 0 : i32
    %52 = vector.broadcast %c0_i32 : i32 to vector<8x1xi32>
    %53 = arith.addi %52, %8 : vector<8x1xi32>
    %c16_i32 = arith.constant 16 : i32
    %54 = vector.broadcast %c16_i32 : i32 to vector<8x1xi32>
    %55 = arith.cmpi slt, %53, %54 : vector<8x1xi32>
    %cst_21 = arith.constant 1.000000e+00 : f32
    %cst_22 = arith.constant 0.000000e+00 : f32
    %56 = vector.broadcast %cst_21 : f32 to vector<8x1xf32>
    %57 = vector.broadcast %cst_22 : f32 to vector<8x1xf32>
    %58 = arith.select %55, %56, %57 : vector<8x1xi1>, vector<8x1xf32>
    %c0_i32_23 = arith.constant 0 : i32
    %59 = vector.broadcast %c0_i32_23 : i32 to vector<8x128xi32>
    %60 = arith.cmpi eq, %7, %59 : vector<8x128xi32>
    %cst_24 = arith.constant 0.000000e+00 : f32
    %61 = vector.broadcast %cst_24 : f32 to vector<8x128xf32>
    %62 = arith.select %60, %51, %61 : vector<8x128xi1>, vector<8x128xf32>
    %cst_25 = arith.constant dense<0xFF800000> : vector<8xf32>
    %63 = vector.multi_reduction <maximumf>, %62, %cst_25 [1] : vector<8x128xf32> to vector<8xf32>
    %64 = vector.shape_cast %63 : vector<8xf32> to vector<8x1xf32>
    %c1_i32 = arith.constant 1 : i32
    %65 = vector.broadcast %c1_i32 : i32 to vector<8x128xi32>
    %66 = arith.cmpi eq, %7, %65 : vector<8x128xi32>
    %cst_26 = arith.constant 0.000000e+00 : f32
    %67 = vector.broadcast %cst_26 : f32 to vector<8x128xf32>
    %68 = arith.select %66, %51, %67 : vector<8x128xi1>, vector<8x128xf32>
    %cst_27 = arith.constant dense<0xFF800000> : vector<8xf32>
    %69 = vector.multi_reduction <maximumf>, %68, %cst_27 [1] : vector<8x128xf32> to vector<8xf32>
    %70 = vector.shape_cast %69 : vector<8xf32> to vector<8x1xf32>
    %c2_i32 = arith.constant 2 : i32
    %71 = vector.broadcast %c2_i32 : i32 to vector<8x128xi32>
    %72 = arith.cmpi eq, %7, %71 : vector<8x128xi32>
    %cst_28 = arith.constant 0.000000e+00 : f32
    %73 = vector.broadcast %cst_28 : f32 to vector<8x128xf32>
    %74 = arith.select %72, %51, %73 : vector<8x128xi1>, vector<8x128xf32>
    %cst_29 = arith.constant dense<0xFF800000> : vector<8xf32>
    %75 = vector.multi_reduction <maximumf>, %74, %cst_29 [1] : vector<8x128xf32> to vector<8xf32>
    %76 = vector.shape_cast %75 : vector<8xf32> to vector<8x1xf32>
    %c3_i32 = arith.constant 3 : i32
    %77 = vector.broadcast %c3_i32 : i32 to vector<8x128xi32>
    %78 = arith.cmpi eq, %7, %77 : vector<8x128xi32>
    %cst_30 = arith.constant 0.000000e+00 : f32
    %79 = vector.broadcast %cst_30 : f32 to vector<8x128xf32>
    %80 = arith.select %78, %51, %79 : vector<8x128xi1>, vector<8x128xf32>
    %cst_31 = arith.constant dense<0xFF800000> : vector<8xf32>
    %81 = vector.multi_reduction <maximumf>, %80, %cst_31 [1] : vector<8x128xf32> to vector<8xf32>
    %82 = vector.shape_cast %81 : vector<8xf32> to vector<8x1xf32>
    %c4_i32 = arith.constant 4 : i32
    %83 = vector.broadcast %c4_i32 : i32 to vector<8x128xi32>
    %84 = arith.cmpi eq, %7, %83 : vector<8x128xi32>
    %cst_32 = arith.constant 0.000000e+00 : f32
    %85 = vector.broadcast %cst_32 : f32 to vector<8x128xf32>
    %86 = arith.select %84, %51, %85 : vector<8x128xi1>, vector<8x128xf32>
    %cst_33 = arith.constant dense<0xFF800000> : vector<8xf32>
    %87 = vector.multi_reduction <maximumf>, %86, %cst_33 [1] : vector<8x128xf32> to vector<8xf32>
    %88 = vector.shape_cast %87 : vector<8xf32> to vector<8x1xf32>
    %c5_i32 = arith.constant 5 : i32
    %89 = vector.broadcast %c5_i32 : i32 to vector<8x128xi32>
    %90 = arith.cmpi eq, %7, %89 : vector<8x128xi32>
    %cst_34 = arith.constant 0.000000e+00 : f32
    %91 = vector.broadcast %cst_34 : f32 to vector<8x128xf32>
    %92 = arith.select %90, %51, %91 : vector<8x128xi1>, vector<8x128xf32>
    %cst_35 = arith.constant dense<0xFF800000> : vector<8xf32>
    %93 = vector.multi_reduction <maximumf>, %92, %cst_35 [1] : vector<8x128xf32> to vector<8xf32>
    %94 = vector.shape_cast %93 : vector<8xf32> to vector<8x1xf32>
    %c6_i32 = arith.constant 6 : i32
    %95 = vector.broadcast %c6_i32 : i32 to vector<8x128xi32>
    %96 = arith.cmpi eq, %7, %95 : vector<8x128xi32>
    %cst_36 = arith.constant 0.000000e+00 : f32
    %97 = vector.broadcast %cst_36 : f32 to vector<8x128xf32>
    %98 = arith.select %96, %51, %97 : vector<8x128xi1>, vector<8x128xf32>
    %cst_37 = arith.constant dense<0xFF800000> : vector<8xf32>
    %99 = vector.multi_reduction <maximumf>, %98, %cst_37 [1] : vector<8x128xf32> to vector<8xf32>
    %100 = vector.shape_cast %99 : vector<8xf32> to vector<8x1xf32>
    %101 = vector.extract_strided_slice %58 {offsets = [0, 0], sizes = [1, 1], strides = [1, 1]} : vector<8x1xf32> to vector<1x1xf32>
    %cst_38 = arith.constant 0.000000e+00 : f32
    %102 = vector.broadcast %cst_38 : f32 to vector<8x1xf32>
    %103 = arith.cmpf ogt, %64, %102 : vector<8x1xf32>
    %cst_39 = arith.constant 0.000000e+00 : f32
    %104 = vector.broadcast %cst_39 : f32 to vector<1x1xf32>
    %105 = arith.cmpf ogt, %101, %104 : vector<1x1xf32>
    %106 = vector.broadcast %105 : vector<1x1xi1> to vector<8x1xi1>
    %107 = arith.andi %103, %106 : vector<8x1xi1>
    %c0_i32_40 = arith.constant 0 : i32
    %108 = vector.broadcast %c0_i32_40 : i32 to vector<8x1xi32>
    %109 = arith.cmpi sgt, %8, %108 : vector<8x1xi32>
    %110 = arith.andi %107, %109 : vector<8x1xi1>
    %cst_41 = arith.constant 0.000000e+00 : f32
    %111 = vector.broadcast %cst_41 : f32 to vector<8x1xf32>
    %112 = arith.select %110, %111, %58 : vector<8x1xi1>, vector<8x1xf32>
    %113 = vector.extract_strided_slice %112 {offsets = [1, 0], sizes = [1, 1], strides = [1, 1]} : vector<8x1xf32> to vector<1x1xf32>
    %cst_42 = arith.constant 0.000000e+00 : f32
    %114 = vector.broadcast %cst_42 : f32 to vector<8x1xf32>
    %115 = arith.cmpf ogt, %70, %114 : vector<8x1xf32>
    %cst_43 = arith.constant 0.000000e+00 : f32
    %116 = vector.broadcast %cst_43 : f32 to vector<1x1xf32>
    %117 = arith.cmpf ogt, %113, %116 : vector<1x1xf32>
    %118 = vector.broadcast %117 : vector<1x1xi1> to vector<8x1xi1>
    %119 = arith.andi %115, %118 : vector<8x1xi1>
    %c1_i32_44 = arith.constant 1 : i32
    %120 = vector.broadcast %c1_i32_44 : i32 to vector<8x1xi32>
    %121 = arith.cmpi sgt, %8, %120 : vector<8x1xi32>
    %122 = arith.andi %119, %121 : vector<8x1xi1>
    %cst_45 = arith.constant 0.000000e+00 : f32
    %123 = vector.broadcast %cst_45 : f32 to vector<8x1xf32>
    %124 = arith.select %122, %123, %112 : vector<8x1xi1>, vector<8x1xf32>
    %125 = vector.extract_strided_slice %124 {offsets = [2, 0], sizes = [1, 1], strides = [1, 1]} : vector<8x1xf32> to vector<1x1xf32>
    %cst_46 = arith.constant 0.000000e+00 : f32
    %126 = vector.broadcast %cst_46 : f32 to vector<8x1xf32>
    %127 = arith.cmpf ogt, %76, %126 : vector<8x1xf32>
    %cst_47 = arith.constant 0.000000e+00 : f32
    %128 = vector.broadcast %cst_47 : f32 to vector<1x1xf32>
    %129 = arith.cmpf ogt, %125, %128 : vector<1x1xf32>
    %130 = vector.broadcast %129 : vector<1x1xi1> to vector<8x1xi1>
    %131 = arith.andi %127, %130 : vector<8x1xi1>
    %c2_i32_48 = arith.constant 2 : i32
    %132 = vector.broadcast %c2_i32_48 : i32 to vector<8x1xi32>
    %133 = arith.cmpi sgt, %8, %132 : vector<8x1xi32>
    %134 = arith.andi %131, %133 : vector<8x1xi1>
    %cst_49 = arith.constant 0.000000e+00 : f32
    %135 = vector.broadcast %cst_49 : f32 to vector<8x1xf32>
    %136 = arith.select %134, %135, %124 : vector<8x1xi1>, vector<8x1xf32>
    %137 = vector.extract_strided_slice %136 {offsets = [3, 0], sizes = [1, 1], strides = [1, 1]} : vector<8x1xf32> to vector<1x1xf32>
    %cst_50 = arith.constant 0.000000e+00 : f32
    %138 = vector.broadcast %cst_50 : f32 to vector<8x1xf32>
    %139 = arith.cmpf ogt, %82, %138 : vector<8x1xf32>
    %cst_51 = arith.constant 0.000000e+00 : f32
    %140 = vector.broadcast %cst_51 : f32 to vector<1x1xf32>
    %141 = arith.cmpf ogt, %137, %140 : vector<1x1xf32>
    %142 = vector.broadcast %141 : vector<1x1xi1> to vector<8x1xi1>
    %143 = arith.andi %139, %142 : vector<8x1xi1>
    %c3_i32_52 = arith.constant 3 : i32
    %144 = vector.broadcast %c3_i32_52 : i32 to vector<8x1xi32>
    %145 = arith.cmpi sgt, %8, %144 : vector<8x1xi32>
    %146 = arith.andi %143, %145 : vector<8x1xi1>
    %cst_53 = arith.constant 0.000000e+00 : f32
    %147 = vector.broadcast %cst_53 : f32 to vector<8x1xf32>
    %148 = arith.select %146, %147, %136 : vector<8x1xi1>, vector<8x1xf32>
    %149 = vector.extract_strided_slice %148 {offsets = [4, 0], sizes = [1, 1], strides = [1, 1]} : vector<8x1xf32> to vector<1x1xf32>
    %cst_54 = arith.constant 0.000000e+00 : f32
    %150 = vector.broadcast %cst_54 : f32 to vector<8x1xf32>
    %151 = arith.cmpf ogt, %88, %150 : vector<8x1xf32>
    %cst_55 = arith.constant 0.000000e+00 : f32
    %152 = vector.broadcast %cst_55 : f32 to vector<1x1xf32>
    %153 = arith.cmpf ogt, %149, %152 : vector<1x1xf32>
    %154 = vector.broadcast %153 : vector<1x1xi1> to vector<8x1xi1>
    %155 = arith.andi %151, %154 : vector<8x1xi1>
    %c4_i32_56 = arith.constant 4 : i32
    %156 = vector.broadcast %c4_i32_56 : i32 to vector<8x1xi32>
    %157 = arith.cmpi sgt, %8, %156 : vector<8x1xi32>
    %158 = arith.andi %155, %157 : vector<8x1xi1>
    %cst_57 = arith.constant 0.000000e+00 : f32
    %159 = vector.broadcast %cst_57 : f32 to vector<8x1xf32>
    %160 = arith.select %158, %159, %148 : vector<8x1xi1>, vector<8x1xf32>
    %161 = vector.extract_strided_slice %160 {offsets = [5, 0], sizes = [1, 1], strides = [1, 1]} : vector<8x1xf32> to vector<1x1xf32>
    %cst_58 = arith.constant 0.000000e+00 : f32
    %162 = vector.broadcast %cst_58 : f32 to vector<8x1xf32>
    %163 = arith.cmpf ogt, %94, %162 : vector<8x1xf32>
    %cst_59 = arith.constant 0.000000e+00 : f32
    %164 = vector.broadcast %cst_59 : f32 to vector<1x1xf32>
    %165 = arith.cmpf ogt, %161, %164 : vector<1x1xf32>
    %166 = vector.broadcast %165 : vector<1x1xi1> to vector<8x1xi1>
    %167 = arith.andi %163, %166 : vector<8x1xi1>
    %c5_i32_60 = arith.constant 5 : i32
    %168 = vector.broadcast %c5_i32_60 : i32 to vector<8x1xi32>
    %169 = arith.cmpi sgt, %8, %168 : vector<8x1xi32>
    %170 = arith.andi %167, %169 : vector<8x1xi1>
    %cst_61 = arith.constant 0.000000e+00 : f32
    %171 = vector.broadcast %cst_61 : f32 to vector<8x1xf32>
    %172 = arith.select %170, %171, %160 : vector<8x1xi1>, vector<8x1xf32>
    %173 = vector.extract_strided_slice %172 {offsets = [6, 0], sizes = [1, 1], strides = [1, 1]} : vector<8x1xf32> to vector<1x1xf32>
    %cst_62 = arith.constant 0.000000e+00 : f32
    %174 = vector.broadcast %cst_62 : f32 to vector<8x1xf32>
    %175 = arith.cmpf ogt, %100, %174 : vector<8x1xf32>
    %cst_63 = arith.constant 0.000000e+00 : f32
    %176 = vector.broadcast %cst_63 : f32 to vector<1x1xf32>
    %177 = arith.cmpf ogt, %173, %176 : vector<1x1xf32>
    %178 = vector.broadcast %177 : vector<1x1xi1> to vector<8x1xi1>
    %179 = arith.andi %175, %178 : vector<8x1xi1>
    %c6_i32_64 = arith.constant 6 : i32
    %180 = vector.broadcast %c6_i32_64 : i32 to vector<8x1xi32>
    %181 = arith.cmpi sgt, %8, %180 : vector<8x1xi32>
    %182 = arith.andi %179, %181 : vector<8x1xi1>
    %cst_65 = arith.constant 0.000000e+00 : f32
    %183 = vector.broadcast %cst_65 : f32 to vector<8x1xf32>
    %184 = arith.select %182, %183, %172 : vector<8x1xi1>, vector<8x1xf32>
    %c0_i32_66 = arith.constant 0 : i32
    %185 = vector.broadcast %c0_i32_66 : i32 to vector<8x128xi32>
    %186 = arith.cmpi eq, %10, %185 : vector<8x128xi32>
    %cst_67 = arith.constant 0.000000e+00 : f32
    %187 = vector.shape_cast %184 : vector<8x1xf32> to vector<8x1xf32>
    %188 = vector.broadcast %187 : vector<8x1xf32> to vector<8x128xf32>
    %189 = vector.broadcast %cst_67 : f32 to vector<8x128xf32>
    %190 = arith.select %186, %188, %189 : vector<8x128xi1>, vector<8x128xf32>
    %cst_68 = arith.constant dense<0xFF800000> : vector<128xf32>
    %191 = vector.multi_reduction <maximumf>, %190, %cst_68 [0] : vector<8x128xf32> to vector<128xf32>
    %192 = vector.shape_cast %191 : vector<128xf32> to vector<1x128xf32>
    %193 = arith.maximumf %11, %192 : vector<1x128xf32>
    %c0_69 = arith.constant 0 : index
    %c8 = arith.constant 8 : index
    %c0_70 = arith.constant 0 : index
    %194 = vector.load %arg0[%c0_69, %c8, %c0_70] : memref<4x16x1xf32, #tpu.memory_space<vmem>>, vector<1x8x1xf32>
    %195 = vector.shape_cast %194 : vector<1x8x1xf32> to vector<8x1xf32>
    %c1_71 = arith.constant 1 : index
    %c8_72 = arith.constant 8 : index
    %c0_73 = arith.constant 0 : index
    %196 = vector.load %arg0[%c1_71, %c8_72, %c0_73] : memref<4x16x1xf32, #tpu.memory_space<vmem>>, vector<1x8x1xf32>
    %197 = vector.shape_cast %196 : vector<1x8x1xf32> to vector<8x1xf32>
    %c2_74 = arith.constant 2 : index
    %c8_75 = arith.constant 8 : index
    %c0_76 = arith.constant 0 : index
    %198 = vector.load %arg0[%c2_74, %c8_75, %c0_76] : memref<4x16x1xf32, #tpu.memory_space<vmem>>, vector<1x8x1xf32>
    %199 = vector.shape_cast %198 : vector<1x8x1xf32> to vector<8x1xf32>
    %c3_77 = arith.constant 3 : index
    %c8_78 = arith.constant 8 : index
    %c0_79 = arith.constant 0 : index
    %200 = vector.load %arg0[%c3_77, %c8_78, %c0_79] : memref<4x16x1xf32, #tpu.memory_space<vmem>>, vector<1x8x1xf32>
    %201 = vector.shape_cast %200 : vector<1x8x1xf32> to vector<8x1xf32>
    %202 = vector.broadcast %199 : vector<8x1xf32> to vector<8x128xf32>
    %203 = vector.broadcast %2 : vector<1x128xf32> to vector<8x128xf32>
    %204 = arith.minimumf %202, %203 : vector<8x128xf32>
    %205 = vector.broadcast %195 : vector<8x1xf32> to vector<8x128xf32>
    %206 = vector.broadcast %0 : vector<1x128xf32> to vector<8x128xf32>
    %207 = arith.maximumf %205, %206 : vector<8x128xf32>
    %208 = arith.subf %204, %207 : vector<8x128xf32>
    %cst_80 = arith.constant 0.000000e+00 : f32
    %209 = vector.broadcast %cst_80 : f32 to vector<8x128xf32>
    %210 = arith.maximumf %208, %209 : vector<8x128xf32>
    %211 = vector.broadcast %201 : vector<8x1xf32> to vector<8x128xf32>
    %212 = vector.broadcast %3 : vector<1x128xf32> to vector<8x128xf32>
    %213 = arith.minimumf %211, %212 : vector<8x128xf32>
    %214 = vector.broadcast %197 : vector<8x1xf32> to vector<8x128xf32>
    %215 = vector.broadcast %1 : vector<1x128xf32> to vector<8x128xf32>
    %216 = arith.maximumf %214, %215 : vector<8x128xf32>
    %217 = arith.subf %213, %216 : vector<8x128xf32>
    %cst_81 = arith.constant 0.000000e+00 : f32
    %218 = vector.broadcast %cst_81 : f32 to vector<8x128xf32>
    %219 = arith.maximumf %217, %218 : vector<8x128xf32>
    %220 = arith.mulf %210, %219 : vector<8x128xf32>
    %221 = arith.subf %199, %195 : vector<8x1xf32>
    %222 = arith.subf %201, %197 : vector<8x1xf32>
    %223 = arith.mulf %221, %222 : vector<8x1xf32>
    %224 = vector.broadcast %223 : vector<8x1xf32> to vector<8x128xf32>
    %225 = vector.broadcast %6 : vector<1x128xf32> to vector<8x128xf32>
    %226 = arith.addf %224, %225 : vector<8x128xf32>
    %227 = arith.subf %226, %220 : vector<8x128xf32>
    %cst_82 = arith.constant 5.000000e-01 : f32
    %228 = vector.broadcast %cst_82 : f32 to vector<8x128xf32>
    %229 = arith.mulf %228, %227 : vector<8x128xf32>
    %230 = arith.cmpf ogt, %220, %229 : vector<8x128xf32>
    %cst_83 = arith.constant 1.000000e+00 : f32
    %cst_84 = arith.constant 0.000000e+00 : f32
    %231 = vector.broadcast %cst_83 : f32 to vector<8x128xf32>
    %232 = vector.broadcast %cst_84 : f32 to vector<8x128xf32>
    %233 = arith.select %230, %231, %232 : vector<8x128xi1>, vector<8x128xf32>
    %c8_i32 = arith.constant 8 : i32
    %234 = vector.broadcast %c8_i32 : i32 to vector<8x1xi32>
    %235 = arith.addi %234, %8 : vector<8x1xi32>
    %c16_i32_85 = arith.constant 16 : i32
    %236 = vector.broadcast %c16_i32_85 : i32 to vector<8x1xi32>
    %237 = arith.cmpi slt, %235, %236 : vector<8x1xi32>
    %238 = vector.broadcast %193 : vector<1x128xf32> to vector<8x128xf32>
    %239 = arith.mulf %233, %238 : vector<8x128xf32>
    %cst_86 = arith.constant dense<0xFF800000> : vector<8xf32>
    %240 = vector.multi_reduction <maximumf>, %239, %cst_86 [1] : vector<8x128xf32> to vector<8xf32>
    %241 = vector.shape_cast %240 : vector<8xf32> to vector<8x1xf32>
    %cst_87 = arith.constant 0.000000e+00 : f32
    %242 = vector.broadcast %cst_87 : f32 to vector<8x1xf32>
    %243 = arith.cmpf ole, %241, %242 : vector<8x1xf32>
    %244 = arith.andi %237, %243 : vector<8x1xi1>
    %cst_88 = arith.constant 1.000000e+00 : f32
    %cst_89 = arith.constant 0.000000e+00 : f32
    %245 = vector.broadcast %cst_88 : f32 to vector<8x1xf32>
    %246 = vector.broadcast %cst_89 : f32 to vector<8x1xf32>
    %247 = arith.select %244, %245, %246 : vector<8x1xi1>, vector<8x1xf32>
    %c8_i32_90 = arith.constant 8 : i32
    %248 = vector.broadcast %c8_i32_90 : i32 to vector<8x128xi32>
    %249 = arith.cmpi eq, %7, %248 : vector<8x128xi32>
    %cst_91 = arith.constant 0.000000e+00 : f32
    %250 = vector.broadcast %cst_91 : f32 to vector<8x128xf32>
    %251 = arith.select %249, %233, %250 : vector<8x128xi1>, vector<8x128xf32>
    %cst_92 = arith.constant dense<0xFF800000> : vector<8xf32>
    %252 = vector.multi_reduction <maximumf>, %251, %cst_92 [1] : vector<8x128xf32> to vector<8xf32>
    %253 = vector.shape_cast %252 : vector<8xf32> to vector<8x1xf32>
    %c9_i32 = arith.constant 9 : i32
    %254 = vector.broadcast %c9_i32 : i32 to vector<8x128xi32>
    %255 = arith.cmpi eq, %7, %254 : vector<8x128xi32>
    %cst_93 = arith.constant 0.000000e+00 : f32
    %256 = vector.broadcast %cst_93 : f32 to vector<8x128xf32>
    %257 = arith.select %255, %233, %256 : vector<8x128xi1>, vector<8x128xf32>
    %cst_94 = arith.constant dense<0xFF800000> : vector<8xf32>
    %258 = vector.multi_reduction <maximumf>, %257, %cst_94 [1] : vector<8x128xf32> to vector<8xf32>
    %259 = vector.shape_cast %258 : vector<8xf32> to vector<8x1xf32>
    %c10_i32 = arith.constant 10 : i32
    %260 = vector.broadcast %c10_i32 : i32 to vector<8x128xi32>
    %261 = arith.cmpi eq, %7, %260 : vector<8x128xi32>
    %cst_95 = arith.constant 0.000000e+00 : f32
    %262 = vector.broadcast %cst_95 : f32 to vector<8x128xf32>
    %263 = arith.select %261, %233, %262 : vector<8x128xi1>, vector<8x128xf32>
    %cst_96 = arith.constant dense<0xFF800000> : vector<8xf32>
    %264 = vector.multi_reduction <maximumf>, %263, %cst_96 [1] : vector<8x128xf32> to vector<8xf32>
    %265 = vector.shape_cast %264 : vector<8xf32> to vector<8x1xf32>
    %c11_i32 = arith.constant 11 : i32
    %266 = vector.broadcast %c11_i32 : i32 to vector<8x128xi32>
    %267 = arith.cmpi eq, %7, %266 : vector<8x128xi32>
    %cst_97 = arith.constant 0.000000e+00 : f32
    %268 = vector.broadcast %cst_97 : f32 to vector<8x128xf32>
    %269 = arith.select %267, %233, %268 : vector<8x128xi1>, vector<8x128xf32>
    %cst_98 = arith.constant dense<0xFF800000> : vector<8xf32>
    %270 = vector.multi_reduction <maximumf>, %269, %cst_98 [1] : vector<8x128xf32> to vector<8xf32>
    %271 = vector.shape_cast %270 : vector<8xf32> to vector<8x1xf32>
    %c12_i32 = arith.constant 12 : i32
    %272 = vector.broadcast %c12_i32 : i32 to vector<8x128xi32>
    %273 = arith.cmpi eq, %7, %272 : vector<8x128xi32>
    %cst_99 = arith.constant 0.000000e+00 : f32
    %274 = vector.broadcast %cst_99 : f32 to vector<8x128xf32>
    %275 = arith.select %273, %233, %274 : vector<8x128xi1>, vector<8x128xf32>
    %cst_100 = arith.constant dense<0xFF800000> : vector<8xf32>
    %276 = vector.multi_reduction <maximumf>, %275, %cst_100 [1] : vector<8x128xf32> to vector<8xf32>
    %277 = vector.shape_cast %276 : vector<8xf32> to vector<8x1xf32>
    %c13_i32 = arith.constant 13 : i32
    %278 = vector.broadcast %c13_i32 : i32 to vector<8x128xi32>
    %279 = arith.cmpi eq, %7, %278 : vector<8x128xi32>
    %cst_101 = arith.constant 0.000000e+00 : f32
    %280 = vector.broadcast %cst_101 : f32 to vector<8x128xf32>
    %281 = arith.select %279, %233, %280 : vector<8x128xi1>, vector<8x128xf32>
    %cst_102 = arith.constant dense<0xFF800000> : vector<8xf32>
    %282 = vector.multi_reduction <maximumf>, %281, %cst_102 [1] : vector<8x128xf32> to vector<8xf32>
    %283 = vector.shape_cast %282 : vector<8xf32> to vector<8x1xf32>
    %c14_i32 = arith.constant 14 : i32
    %284 = vector.broadcast %c14_i32 : i32 to vector<8x128xi32>
    %285 = arith.cmpi eq, %7, %284 : vector<8x128xi32>
    %cst_103 = arith.constant 0.000000e+00 : f32
    %286 = vector.broadcast %cst_103 : f32 to vector<8x128xf32>
    %287 = arith.select %285, %233, %286 : vector<8x128xi1>, vector<8x128xf32>
    %cst_104 = arith.constant dense<0xFF800000> : vector<8xf32>
    %288 = vector.multi_reduction <maximumf>, %287, %cst_104 [1] : vector<8x128xf32> to vector<8xf32>
    %289 = vector.shape_cast %288 : vector<8xf32> to vector<8x1xf32>
    %290 = vector.extract_strided_slice %247 {offsets = [0, 0], sizes = [1, 1], strides = [1, 1]} : vector<8x1xf32> to vector<1x1xf32>
    %cst_105 = arith.constant 0.000000e+00 : f32
    %291 = vector.broadcast %cst_105 : f32 to vector<8x1xf32>
    %292 = arith.cmpf ogt, %253, %291 : vector<8x1xf32>
    %cst_106 = arith.constant 0.000000e+00 : f32
    %293 = vector.broadcast %cst_106 : f32 to vector<1x1xf32>
    %294 = arith.cmpf ogt, %290, %293 : vector<1x1xf32>
    %295 = vector.broadcast %294 : vector<1x1xi1> to vector<8x1xi1>
    %296 = arith.andi %292, %295 : vector<8x1xi1>
    %c0_i32_107 = arith.constant 0 : i32
    %297 = vector.broadcast %c0_i32_107 : i32 to vector<8x1xi32>
    %298 = arith.cmpi sgt, %8, %297 : vector<8x1xi32>
    %299 = arith.andi %296, %298 : vector<8x1xi1>
    %cst_108 = arith.constant 0.000000e+00 : f32
    %300 = vector.broadcast %cst_108 : f32 to vector<8x1xf32>
    %301 = arith.select %299, %300, %247 : vector<8x1xi1>, vector<8x1xf32>
    %302 = vector.extract_strided_slice %301 {offsets = [1, 0], sizes = [1, 1], strides = [1, 1]} : vector<8x1xf32> to vector<1x1xf32>
    %cst_109 = arith.constant 0.000000e+00 : f32
    %303 = vector.broadcast %cst_109 : f32 to vector<8x1xf32>
    %304 = arith.cmpf ogt, %259, %303 : vector<8x1xf32>
    %cst_110 = arith.constant 0.000000e+00 : f32
    %305 = vector.broadcast %cst_110 : f32 to vector<1x1xf32>
    %306 = arith.cmpf ogt, %302, %305 : vector<1x1xf32>
    %307 = vector.broadcast %306 : vector<1x1xi1> to vector<8x1xi1>
    %308 = arith.andi %304, %307 : vector<8x1xi1>
    %c1_i32_111 = arith.constant 1 : i32
    %309 = vector.broadcast %c1_i32_111 : i32 to vector<8x1xi32>
    %310 = arith.cmpi sgt, %8, %309 : vector<8x1xi32>
    %311 = arith.andi %308, %310 : vector<8x1xi1>
    %cst_112 = arith.constant 0.000000e+00 : f32
    %312 = vector.broadcast %cst_112 : f32 to vector<8x1xf32>
    %313 = arith.select %311, %312, %301 : vector<8x1xi1>, vector<8x1xf32>
    %314 = vector.extract_strided_slice %313 {offsets = [2, 0], sizes = [1, 1], strides = [1, 1]} : vector<8x1xf32> to vector<1x1xf32>
    %cst_113 = arith.constant 0.000000e+00 : f32
    %315 = vector.broadcast %cst_113 : f32 to vector<8x1xf32>
    %316 = arith.cmpf ogt, %265, %315 : vector<8x1xf32>
    %cst_114 = arith.constant 0.000000e+00 : f32
    %317 = vector.broadcast %cst_114 : f32 to vector<1x1xf32>
    %318 = arith.cmpf ogt, %314, %317 : vector<1x1xf32>
    %319 = vector.broadcast %318 : vector<1x1xi1> to vector<8x1xi1>
    %320 = arith.andi %316, %319 : vector<8x1xi1>
    %c2_i32_115 = arith.constant 2 : i32
    %321 = vector.broadcast %c2_i32_115 : i32 to vector<8x1xi32>
    %322 = arith.cmpi sgt, %8, %321 : vector<8x1xi32>
    %323 = arith.andi %320, %322 : vector<8x1xi1>
    %cst_116 = arith.constant 0.000000e+00 : f32
    %324 = vector.broadcast %cst_116 : f32 to vector<8x1xf32>
    %325 = arith.select %323, %324, %313 : vector<8x1xi1>, vector<8x1xf32>
    %326 = vector.extract_strided_slice %325 {offsets = [3, 0], sizes = [1, 1], strides = [1, 1]} : vector<8x1xf32> to vector<1x1xf32>
    %cst_117 = arith.constant 0.000000e+00 : f32
    %327 = vector.broadcast %cst_117 : f32 to vector<8x1xf32>
    %328 = arith.cmpf ogt, %271, %327 : vector<8x1xf32>
    %cst_118 = arith.constant 0.000000e+00 : f32
    %329 = vector.broadcast %cst_118 : f32 to vector<1x1xf32>
    %330 = arith.cmpf ogt, %326, %329 : vector<1x1xf32>
    %331 = vector.broadcast %330 : vector<1x1xi1> to vector<8x1xi1>
    %332 = arith.andi %328, %331 : vector<8x1xi1>
    %c3_i32_119 = arith.constant 3 : i32
    %333 = vector.broadcast %c3_i32_119 : i32 to vector<8x1xi32>
    %334 = arith.cmpi sgt, %8, %333 : vector<8x1xi32>
    %335 = arith.andi %332, %334 : vector<8x1xi1>
    %cst_120 = arith.constant 0.000000e+00 : f32
    %336 = vector.broadcast %cst_120 : f32 to vector<8x1xf32>
    %337 = arith.select %335, %336, %325 : vector<8x1xi1>, vector<8x1xf32>
    %338 = vector.extract_strided_slice %337 {offsets = [4, 0], sizes = [1, 1], strides = [1, 1]} : vector<8x1xf32> to vector<1x1xf32>
    %cst_121 = arith.constant 0.000000e+00 : f32
    %339 = vector.broadcast %cst_121 : f32 to vector<8x1xf32>
    %340 = arith.cmpf ogt, %277, %339 : vector<8x1xf32>
    %cst_122 = arith.constant 0.000000e+00 : f32
    %341 = vector.broadcast %cst_122 : f32 to vector<1x1xf32>
    %342 = arith.cmpf ogt, %338, %341 : vector<1x1xf32>
    %343 = vector.broadcast %342 : vector<1x1xi1> to vector<8x1xi1>
    %344 = arith.andi %340, %343 : vector<8x1xi1>
    %c4_i32_123 = arith.constant 4 : i32
    %345 = vector.broadcast %c4_i32_123 : i32 to vector<8x1xi32>
    %346 = arith.cmpi sgt, %8, %345 : vector<8x1xi32>
    %347 = arith.andi %344, %346 : vector<8x1xi1>
    %cst_124 = arith.constant 0.000000e+00 : f32
    %348 = vector.broadcast %cst_124 : f32 to vector<8x1xf32>
    %349 = arith.select %347, %348, %337 : vector<8x1xi1>, vector<8x1xf32>
    %350 = vector.extract_strided_slice %349 {offsets = [5, 0], sizes = [1, 1], strides = [1, 1]} : vector<8x1xf32> to vector<1x1xf32>
    %cst_125 = arith.constant 0.000000e+00 : f32
    %351 = vector.broadcast %cst_125 : f32 to vector<8x1xf32>
    %352 = arith.cmpf ogt, %283, %351 : vector<8x1xf32>
    %cst_126 = arith.constant 0.000000e+00 : f32
    %353 = vector.broadcast %cst_126 : f32 to vector<1x1xf32>
    %354 = arith.cmpf ogt, %350, %353 : vector<1x1xf32>
    %355 = vector.broadcast %354 : vector<1x1xi1> to vector<8x1xi1>
    %356 = arith.andi %352, %355 : vector<8x1xi1>
    %c5_i32_127 = arith.constant 5 : i32
    %357 = vector.broadcast %c5_i32_127 : i32 to vector<8x1xi32>
    %358 = arith.cmpi sgt, %8, %357 : vector<8x1xi32>
    %359 = arith.andi %356, %358 : vector<8x1xi1>
    %cst_128 = arith.constant 0.000000e+00 : f32
    %360 = vector.broadcast %cst_128 : f32 to vector<8x1xf32>
    %361 = arith.select %359, %360, %349 : vector<8x1xi1>, vector<8x1xf32>
    %362 = vector.extract_strided_slice %361 {offsets = [6, 0], sizes = [1, 1], strides = [1, 1]} : vector<8x1xf32> to vector<1x1xf32>
    %cst_129 = arith.constant 0.000000e+00 : f32
    %363 = vector.broadcast %cst_129 : f32 to vector<8x1xf32>
    %364 = arith.cmpf ogt, %289, %363 : vector<8x1xf32>
    %cst_130 = arith.constant 0.000000e+00 : f32
    %365 = vector.broadcast %cst_130 : f32 to vector<1x1xf32>
    %366 = arith.cmpf ogt, %362, %365 : vector<1x1xf32>
    %367 = vector.broadcast %366 : vector<1x1xi1> to vector<8x1xi1>
    %368 = arith.andi %364, %367 : vector<8x1xi1>
    %c6_i32_131 = arith.constant 6 : i32
    %369 = vector.broadcast %c6_i32_131 : i32 to vector<8x1xi32>
    %370 = arith.cmpi sgt, %8, %369 : vector<8x1xi32>
    %371 = arith.andi %368, %370 : vector<8x1xi1>
    %cst_132 = arith.constant 0.000000e+00 : f32
    %372 = vector.broadcast %cst_132 : f32 to vector<8x1xf32>
    %373 = arith.select %371, %372, %361 : vector<8x1xi1>, vector<8x1xf32>
    %c8_i32_133 = arith.constant 8 : i32
    %374 = vector.broadcast %c8_i32_133 : i32 to vector<8x128xi32>
    %375 = arith.cmpi eq, %10, %374 : vector<8x128xi32>
    %cst_134 = arith.constant 0.000000e+00 : f32
    %376 = vector.shape_cast %373 : vector<8x1xf32> to vector<8x1xf32>
    %377 = vector.broadcast %376 : vector<8x1xf32> to vector<8x128xf32>
    %378 = vector.broadcast %cst_134 : f32 to vector<8x128xf32>
    %379 = arith.select %375, %377, %378 : vector<8x128xi1>, vector<8x128xf32>
    %cst_135 = arith.constant dense<0xFF800000> : vector<128xf32>
    %380 = vector.multi_reduction <maximumf>, %379, %cst_135 [0] : vector<8x128xf32> to vector<128xf32>
    %381 = vector.shape_cast %380 : vector<128xf32> to vector<1x128xf32>
    %382 = arith.maximumf %193, %381 : vector<1x128xf32>
    %c0_136 = arith.constant 0 : index
    %c0_137 = arith.constant 0 : index
    %383 = vector.load %arg2[%c0_136, %c0_137] : memref<1x128xf32, #tpu.memory_space<vmem>>, vector<1x128xf32>
    tpu.vector_store %arg2[%c0_136, %c0_137], %382 {strides = array<i32>} : memref<1x128xf32, #tpu.memory_space<vmem>>, vector<1x128xf32>,
    return
  }
}

</mosaic_0001>

<llo_original>
// kernel: neg.1
$region0: #{neg.1}
  #allocation0 [shape = 's32[1]{0}', space=sflag, size = 0x4, scoped, tag = 'scoped memory for neg.1']
  %s0 = inlined_call_operand.vmem [shape: f32[16], index: 0, kind: input, shape index: {}]
  %s1 = inlined_call_operand.vmem [shape: f32[16], index: 1, kind: output, shape index: {}]
  %v2 = vld [vmem:[%s0] sm:$0x1]
  %3 = xla_tuple %v2
  %4 = xla_tuple %3
  %v5 = vxor.u32 %v2, 2147483648
  %6 = xla_tuple %v5
  %7 = vst [vmem:[%s1] sm:$0x1] %v5

// kernel: nms_without_score_thresholding.1
$region0: #{nms_without_score_thresholding.1}
  #allocation0 [shape = 'u32[]', space=smem, size = 0x4, offset = 0x4, fixed_abs, tag = 'smem constant byte address 0x4 - core index']
  #allocation1 [shape = 'u32[144,128]{1,0:T(1,128)}', space=vmem, size = 0x12000, scoped, tag = 'internal scratch']
  %s0 = inlined_call_operand.vmem [shape: f32[4,16,1], index: 0, kind: input, shape index: {}]
  %s1 = inlined_call_operand.vmem [shape: f32[4,128], index: 1, kind: input, shape index: {}]
  %s2 = inlined_call_operand.vmem [shape: f32[1,128], index: 2, kind: output, shape index: {}]
  %s3 = sld [smem:[#allocation0]]
  $region18: #{nms_without_score_thresholding.1} parent=0
    _
  %s5 = ssub.s32 1, %s3
  %s6 = scalar_select 0, %s5, %s3
  // Predicated region
  $region2: #{nms_without_score_thresholding.1} parent=0 // pred_check
    _
  $region3: #{nms_without_score_thresholding.1} parent=0 // pred_check_branch
    %8 = sbr.rel (0) target = $region5
  $region4: #{nms_without_score_thresholding.1} parent=0 // pred_region
    _
  $region5: #{nms_without_score_thresholding.1} parent=0 // pred_fallthru
    _
  // Predicated region
  $region6: #{nms_without_score_thresholding.1} parent=0 // pred_check
    _
  $region7: #{nms_without_score_thresholding.1} parent=0 // pred_check_branch
    %10 = sbr.rel (0) target = $region9
  $region8: #{nms_without_score_thresholding.1} parent=0 // pred_region
    _
  $region9: #{nms_without_score_thresholding.1} parent=0 // pred_fallthru
    _
  %v11 = vld [vmem:[%s1] sm:$0x1]
  %v12 = vld [vmem:[%s1 + $0x1] sm:$0x1]
  %v13 = vld [vmem:[%s1 + $0x2] sm:$0x1]
  %v14 = vld [vmem:[%s1 + $0x3] sm:$0x1]
  %v15 = vsub.f32 %v13, %v11
  %v16 = vsub.f32 %v14, %v12
  %v17 = vmul.f32 %v15, %v16
  %v18 = vlaneseq
  %v19 = vand.u32 %v18, 127
  %v20 = vlaneseq
  %v21 = vshrl.u32 %v20, 7
  %v22 = vsub.s32 %v19, %v21
  %v23 = vld [vmem:[%s0] sm:$0xff]
  %s24 = scalar_lea.vmem %s0, 16
  %v25 = vld [vmem:[%s24] sm:$0xff]
  %s26 = scalar_lea.vmem %s0, 32
  %v27 = vld [vmem:[%s26] sm:$0xff]
  %s28 = scalar_lea.vmem %s0, 48
  %v29 = vld [vmem:[%s28] sm:$0xff]
  %31 = vset.pattern.permute.xlu0 0
  %32 = vperm.xlu0 %31, %v27
  %v33 = vpop.permute.xlu0 %32
  %v35 = vlaneseq
  %v36 = vshrl.u32 %v35, 7
  %v37 = vsub.s32 0, %v36
  %v38 = vrot.slane %v13, %v37
  %v39 = vmin.f32 %v33, %v38
  %41 = vset.pattern.permute.xlu0 0
  %42 = vperm.xlu0 %41, %v23
  %v43 = vpop.permute.xlu0 %42
  %v45 = vlaneseq
  %v46 = vshrl.u32 %v45, 7
  %v47 = vsub.s32 0, %v46
  %v48 = vrot.slane %v11, %v47
  %v49 = vmax.f32 %v43, %v48
  %v50 = vsub.f32 %v39, %v49
  %v51 = vmax.f32 %v50, 0.0
  %53 = vset.pattern.permute.xlu0 0
  %54 = vperm.xlu0 %53, %v29
  %v55 = vpop.permute.xlu0 %54
  %v57 = vlaneseq
  %v58 = vshrl.u32 %v57, 7
  %v59 = vsub.s32 0, %v58
  %v60 = vrot.slane %v14, %v59
  %v61 = vmin.f32 %v55, %v60
  %63 = vset.pattern.permute.xlu0 0
  %64 = vperm.xlu0 %63, %v25
  %v65 = vpop.permute.xlu0 %64
  %v67 = vlaneseq
  %v68 = vshrl.u32 %v67, 7
  %v69 = vsub.s32 0, %v68
  %v70 = vrot.slane %v12, %v69
  %v71 = vmax.f32 %v65, %v70
  %v72 = vsub.f32 %v61, %v71
  %v73 = vmax.f32 %v72, 0.0
  %v74 = vmul.f32 %v51, %v73
  %v75 = vsub.f32 %v27, %v23
  %v76 = vsub.f32 %v29, %v25
  %v77 = vmul.f32 %v75, %v76
  %79 = vset.pattern.permute.xlu0 0
  %80 = vperm.xlu0 %79, %v77
  %v81 = vpop.permute.xlu0 %80
  %v83 = vlaneseq
  %v84 = vshrl.u32 %v83, 7
  %v85 = vsub.s32 0, %v84
  %v86 = vrot.slane %v17, %v85
  %v87 = vadd.f32 %v81, %v86
  %v88 = vsub.f32 %v87, %v74
  %v89 = vmul.f32 %v88, 0.5
  %vm90 = vcmp.gt.f32.partialorder %v74, %v89
  %v91 = vsel %vm90, 1.0, 0.0
  %vm92 = vcmp.lt.s32.totalorder %v21, 16
  %v93 = vsel %vm92, 1.0, 0.0
  %vm94 = vcmp.eq.s32.totalorder %v19, 0
  %v95 = vsel %vm94, %v91, 0.0
  %96 = vmax.xlane.f32.xlu0 %v95
  %v97 = vpop.xlane.xlu0 %96
  %vm98 = vcmp.eq.s32.totalorder %v19, 1
  %v99 = vsel %vm98, %v91, 0.0
  %100 = vmax.xlane.f32.xlu0 %v99
  %v101 = vpop.xlane.xlu0 %100
  %vm102 = vcmp.eq.s32.totalorder %v19, 2
  %v103 = vsel %vm102, %v91, 0.0
  %104 = vmax.xlane.f32.xlu0 %v103
  %v105 = vpop.xlane.xlu0 %104
  %vm106 = vcmp.eq.s32.totalorder %v19, 3
  %v107 = vsel %vm106, %v91, 0.0
  %108 = vmax.xlane.f32.xlu0 %v107
  %v109 = vpop.xlane.xlu0 %108
  %vm110 = vcmp.eq.s32.totalorder %v19, 4
  %v111 = vsel %vm110, %v91, 0.0
  %112 = vmax.xlane.f32.xlu0 %v111
  %v113 = vpop.xlane.xlu0 %112
  %vm114 = vcmp.eq.s32.totalorder %v19, 5
  %v115 = vsel %vm114, %v91, 0.0
  %116 = vmax.xlane.f32.xlu0 %v115
  %v117 = vpop.xlane.xlu0 %116
  %vm118 = vcmp.eq.s32.totalorder %v19, 6
  %v119 = vsel %vm118, %v91, 0.0
  %120 = vmax.xlane.f32.xlu0 %v119
  %v121 = vpop.xlane.xlu0 %120
  %vm122 = vcmp.gt.f32.partialorder %v97, 0.0
  %vm123 = vcmp.gt.f32.partialorder %v93, 0.0
  %v124 = vsel %vm123, 1, 0
  %v125 = vlaneseq
  %v126 = vshrl.u32 %v125, 7
  %v127 = vsub.s32 0, %v126
  %v128 = vrot.slane %v124, %v127
  %vm129 = vcmp.eq.s32.totalorder %v128, 1
  %vm130 = vmand %vm122, %vm129
  %vm131 = vcmp.gt.s32.totalorder %v21, 0
  %vm132 = vmand %vm130, %vm131
  %v133 = vsel %vm132, 0.0, %v93
  %vm134 = vcmp.gt.f32.partialorder %v101, 0.0
  %vm135 = vcmp.gt.f32.partialorder %v133, 0.0
  %v136 = vsel %vm135, 1, 0
  %v137 = vlaneseq
  %v138 = vshrl.u32 %v137, 7
  %v139 = vsub.s32 1, %v138
  %v140 = vrot.slane %v136, %v139
  %vm141 = vcmp.eq.s32.totalorder %v140, 1
  %vm142 = vmand %vm134, %vm141
  %vm143 = vcmp.gt.s32.totalorder %v21, 1
  %vm144 = vmand %vm142, %vm143
  %v145 = vsel %vm144, 0.0, %v133
  %vm146 = vcmp.gt.f32.partialorder %v105, 0.0
  %vm147 = vcmp.gt.f32.partialorder %v145, 0.0
  %v148 = vsel %vm147, 1, 0
  %v149 = vlaneseq
  %v150 = vshrl.u32 %v149, 7
  %v151 = vsub.s32 2, %v150
  %v152 = vrot.slane %v148, %v151
  %vm153 = vcmp.eq.s32.totalorder %v152, 1
  %vm154 = vmand %vm146, %vm153
  %vm155 = vcmp.gt.s32.totalorder %v21, 2
  %vm156 = vmand %vm154, %vm155
  %v157 = vsel %vm156, 0.0, %v145
  %vm158 = vcmp.gt.f32.partialorder %v109, 0.0
  %vm159 = vcmp.gt.f32.partialorder %v157, 0.0
  %v160 = vsel %vm159, 1, 0
  %v161 = vlaneseq
  %v162 = vshrl.u32 %v161, 7
  %v163 = vsub.s32 3, %v162
  %v164 = vrot.slane %v160, %v163
  %vm165 = vcmp.eq.s32.totalorder %v164, 1
  %vm166 = vmand %vm158, %vm165
  %vm167 = vcmp.gt.s32.totalorder %v21, 3
  %vm168 = vmand %vm166, %vm167
  %v169 = vsel %vm168, 0.0, %v157
  %vm170 = vcmp.gt.f32.partialorder %v113, 0.0
  %vm171 = vcmp.gt.f32.partialorder %v169, 0.0
  %v172 = vsel %vm171, 1, 0
  %v173 = vlaneseq
  %v174 = vshrl.u32 %v173, 7
  %v175 = vsub.s32 4, %v174
  %v176 = vrot.slane %v172, %v175
  %vm177 = vcmp.eq.s32.totalorder %v176, 1
  %vm178 = vmand %vm170, %vm177
  %vm179 = vcmp.gt.s32.totalorder %v21, 4
  %vm180 = vmand %vm178, %vm179
  %v181 = vsel %vm180, 0.0, %v169
  %vm182 = vcmp.gt.f32.partialorder %v117, 0.0
  %vm183 = vcmp.gt.f32.partialorder %v181, 0.0
  %v184 = vsel %vm183, 1, 0
  %v185 = vlaneseq
  %v186 = vshrl.u32 %v185, 7
  %v187 = vsub.s32 5, %v186
  %v188 = vrot.slane %v184, %v187
  %vm189 = vcmp.eq.s32.totalorder %v188, 1
  %vm190 = vmand %vm182, %vm189
  %vm191 = vcmp.gt.s32.totalorder %v21, 5
  %vm192 = vmand %vm190, %vm191
  %v193 = vsel %vm192, 0.0, %v181
  %vm194 = vcmp.gt.f32.partialorder %v121, 0.0
  %vm195 = vcmp.gt.f32.partialorder %v193, 0.0
  %v196 = vsel %vm195, 1, 0
  %v197 = vlaneseq
  %v198 = vshrl.u32 %v197, 7
  %v199 = vsub.s32 6, %v198
  %v200 = vrot.slane %v196, %v199
  %vm201 = vcmp.eq.s32.totalorder %v200, 1
  %vm202 = vmand %vm194, %vm201
  %vm203 = vcmp.gt.s32.totalorder %v21, 6
  %vm204 = vmand %vm202, %vm203
  %v205 = vsel %vm204, 0.0, %v193
  %vm206 = vcmp.eq.s32.totalorder %v22, 0
  %v207 = vsel %vm206, %v205, 0.0
  %v208 = vrot.slane %v207, 4
  %v209 = vmax.f32 %v207, %v208
  %v210 = vrot.slane %v209, 2
  %v211 = vmax.f32 %v209, %v210
  %v212 = vrot.slane %v211, 1
  %v213 = vmax.f32 %v211, %v212
  %v214 = vmax.f32 %v213, 0.0
  %v215 = vld [vmem:[%s0 + $0x8] sm:$0xff]
  %v216 = vld [vmem:[%s24 + $0x8] sm:$0xff]
  %v217 = vld [vmem:[%s26 + $0x8] sm:$0xff]
  %v218 = vld [vmem:[%s28 + $0x8] sm:$0xff]
  %220 = vset.pattern.permute.xlu0 0
  %221 = vperm.xlu0 %220, %v217
  %v222 = vpop.permute.xlu0 %221
  %v224 = vmin.f32 %v222, %v38
  %226 = vset.pattern.permute.xlu0 0
  %227 = vperm.xlu0 %226, %v215
  %v228 = vpop.permute.xlu0 %227
  %v230 = vmax.f32 %v228, %v48
  %v231 = vsub.f32 %v224, %v230
  %v232 = vmax.f32 %v231, 0.0
  %234 = vset.pattern.permute.xlu0 0
  %235 = vperm.xlu0 %234, %v218
  %v236 = vpop.permute.xlu0 %235
  %v238 = vmin.f32 %v236, %v60
  %240 = vset.pattern.permute.xlu0 0
  %241 = vperm.xlu0 %240, %v216
  %v242 = vpop.permute.xlu0 %241
  %v244 = vmax.f32 %v242, %v70
  %v245 = vsub.f32 %v238, %v244
  %v246 = vmax.f32 %v245, 0.0
  %v247 = vmul.f32 %v232, %v246
  %v248 = vsub.f32 %v217, %v215
  %v249 = vsub.f32 %v218, %v216
  %v250 = vmul.f32 %v248, %v249
  %252 = vset.pattern.permute.xlu0 0
  %253 = vperm.xlu0 %252, %v250
  %v254 = vpop.permute.xlu0 %253
  %v256 = vadd.f32 %v254, %v86
  %v257 = vsub.f32 %v256, %v247
  %v258 = vmul.f32 %v257, 0.5
  %vm259 = vcmp.gt.f32.partialorder %v247, %v258
  %v260 = vsel %vm259, 1.0, 0.0
  %v261 = vadd.s32 %v21, 8
  %vm262 = vcmp.lt.s32.totalorder %v261, 16
  %v263 = vmul.f32 %v260, %v214
  %264 = vmax.xlane.f32.xlu0 %v263
  %v265 = vpop.xlane.xlu0 %264
  %vm266 = vcmp.le.f32.partialorder %v265, 0.0
  %vm267 = vmand %vm262, %vm266
  %v268 = vsel %vm267, 1.0, 0.0
  %vm269 = vcmp.eq.s32.totalorder %v19, 8
  %v270 = vsel %vm269, %v260, 0.0
  %271 = vmax.xlane.f32.xlu0 %v270
  %v272 = vpop.xlane.xlu0 %271
  %vm273 = vcmp.eq.s32.totalorder %v19, 9
  %v274 = vsel %vm273, %v260, 0.0
  %275 = vmax.xlane.f32.xlu0 %v274
  %v276 = vpop.xlane.xlu0 %275
  %vm277 = vcmp.eq.s32.totalorder %v19, 10
  %v278 = vsel %vm277, %v260, 0.0
  %279 = vmax.xlane.f32.xlu0 %v278
  %v280 = vpop.xlane.xlu0 %279
  %vm281 = vcmp.eq.s32.totalorder %v19, 11
  %v282 = vsel %vm281, %v260, 0.0
  %283 = vmax.xlane.f32.xlu0 %v282
  %v284 = vpop.xlane.xlu0 %283
  %vm285 = vcmp.eq.s32.totalorder %v19, 12
  %v286 = vsel %vm285, %v260, 0.0
  %287 = vmax.xlane.f32.xlu0 %v286
  %v288 = vpop.xlane.xlu0 %287
  %vm289 = vcmp.eq.s32.totalorder %v19, 13
  %v290 = vsel %vm289, %v260, 0.0
  %291 = vmax.xlane.f32.xlu0 %v290
  %v292 = vpop.xlane.xlu0 %291
  %vm293 = vcmp.eq.s32.totalorder %v19, 14
  %v294 = vsel %vm293, %v260, 0.0
  %295 = vmax.xlane.f32.xlu0 %v294
  %v296 = vpop.xlane.xlu0 %295
  %vm297 = vcmp.gt.f32.partialorder %v272, 0.0
  %vm298 = vcmp.gt.f32.partialorder %v268, 0.0
  %v299 = vsel %vm298, 1, 0
  %v300 = vlaneseq
  %v301 = vshrl.u32 %v300, 7
  %v302 = vsub.s32 0, %v301
  %v303 = vrot.slane %v299, %v302
  %vm304 = vcmp.eq.s32.totalorder %v303, 1
  %vm305 = vmand %vm297, %vm304
  %vm306 = vmand %vm305, %vm131
  %v307 = vsel %vm306, 0.0, %v268
  %vm308 = vcmp.gt.f32.partialorder %v276, 0.0
  %vm309 = vcmp.gt.f32.partialorder %v307, 0.0
  %v310 = vsel %vm309, 1, 0
  %v311 = vlaneseq
  %v312 = vshrl.u32 %v311, 7
  %v313 = vsub.s32 1, %v312
  %v314 = vrot.slane %v310, %v313
  %vm315 = vcmp.eq.s32.totalorder %v314, 1
  %vm316 = vmand %vm308, %vm315
  %vm317 = vmand %vm316, %vm143
  %v318 = vsel %vm317, 0.0, %v307
  %vm319 = vcmp.gt.f32.partialorder %v280, 0.0
  %vm320 = vcmp.gt.f32.partialorder %v318, 0.0
  %v321 = vsel %vm320, 1, 0
  %v322 = vlaneseq
  %v323 = vshrl.u32 %v322, 7
  %v324 = vsub.s32 2, %v323
  %v325 = vrot.slane %v321, %v324
  %vm326 = vcmp.eq.s32.totalorder %v325, 1
  %vm327 = vmand %vm319, %vm326
  %vm328 = vmand %vm327, %vm155
  %v329 = vsel %vm328, 0.0, %v318
  %vm330 = vcmp.gt.f32.partialorder %v284, 0.0
  %vm331 = vcmp.gt.f32.partialorder %v329, 0.0
  %v332 = vsel %vm331, 1, 0
  %v333 = vlaneseq
  %v334 = vshrl.u32 %v333, 7
  %v335 = vsub.s32 3, %v334
  %v336 = vrot.slane %v332, %v335
  %vm337 = vcmp.eq.s32.totalorder %v336, 1
  %vm338 = vmand %vm330, %vm337
  %vm339 = vmand %vm338, %vm167
  %v340 = vsel %vm339, 0.0, %v329
  %vm341 = vcmp.gt.f32.partialorder %v288, 0.0
  %vm342 = vcmp.gt.f32.partialorder %v340, 0.0
  %v343 = vsel %vm342, 1, 0
  %v344 = vlaneseq
  %v345 = vshrl.u32 %v344, 7
  %v346 = vsub.s32 4, %v345
  %v347 = vrot.slane %v343, %v346
  %vm348 = vcmp.eq.s32.totalorder %v347, 1
  %vm349 = vmand %vm341, %vm348
  %vm350 = vmand %vm349, %vm179
  %v351 = vsel %vm350, 0.0, %v340
  %vm352 = vcmp.gt.f32.partialorder %v292, 0.0
  %vm353 = vcmp.gt.f32.partialorder %v351, 0.0
  %v354 = vsel %vm353, 1, 0
  %v355 = vlaneseq
  %v356 = vshrl.u32 %v355, 7
  %v357 = vsub.s32 5, %v356
  %v358 = vrot.slane %v354, %v357
  %vm359 = vcmp.eq.s32.totalorder %v358, 1
  %vm360 = vmand %vm352, %vm359
  %vm361 = vmand %vm360, %vm191
  %v362 = vsel %vm361, 0.0, %v351
  %vm363 = vcmp.gt.f32.partialorder %v296, 0.0
  %vm364 = vcmp.gt.f32.partialorder %v362, 0.0
  %v365 = vsel %vm364, 1, 0
  %v366 = vlaneseq
  %v367 = vshrl.u32 %v366, 7
  %v368 = vsub.s32 6, %v367
  %v369 = vrot.slane %v365, %v368
  %vm370 = vcmp.eq.s32.totalorder %v369, 1
  %vm371 = vmand %vm363, %vm370
  %vm372 = vmand %vm371, %vm203
  %v373 = vsel %vm372, 0.0, %v362
  %vm374 = vcmp.eq.s32.totalorder %v22, 8
  %v375 = vsel %vm374, %v373, 0.0
  %v376 = vrot.slane %v375, 4
  %v377 = vmax.f32 %v375, %v376
  %v378 = vrot.slane %v377, 2
  %v379 = vmax.f32 %v377, %v378
  %v380 = vrot.slane %v379, 1
  %v381 = vmax.f32 %v379, %v380
  %v382 = vmax.f32 %v214, %v381
  %383 = vst [vmem:[%s2] sm:$0x1] %v382
  // Predicated region
  $region10: #{nms_without_score_thresholding.1} parent=0 // pred_check
    _
  $region11: #{nms_without_score_thresholding.1} parent=0 // pred_check_branch
    %385 = sbr.rel (0) target = $region13
  $region12: #{nms_without_score_thresholding.1} parent=0 // pred_region
    _
  $region13: #{nms_without_score_thresholding.1} parent=0 // pred_fallthru
    _
  // Predicated region
  $region14: #{nms_without_score_thresholding.1} parent=0 // pred_check
    _
  $region15: #{nms_without_score_thresholding.1} parent=0 // pred_check_branch
    %387 = sbr.rel (0) target = $region17
  $region16: #{nms_without_score_thresholding.1} parent=0 // pred_region
    _
  $region17: #{nms_without_score_thresholding.1} parent=0 // pred_fallthru
    _

</llo_original>
